<compile_context>
chip_gen: v7x
topology: tpu7x:2x2x1
jax: 0.10.0
libtpu: 0.0.40
codegen_flags: <defaults>
</compile_context>

<pallas_src>
import jax
import jax.numpy as jnp
import numpy as np
from jax.experimental import pallas as pl
from jax.experimental.pallas import tpu as pltpu

LOG_STD_MAX = 2.0
LOG_STD_MIN = -20.0
LOG_2 = float(np.log(2.0))
HALF_LOG_2PI = float(0.5 * np.log(2.0 * np.pi))


def _round_up(x, m):
    return ((x + m - 1) // m) * m


def policy_kernel(obs_ref, w1_ref, b1_ref, w2_ref, b2_ref,
                  wh_ref, bh_ref, scale_ref, bias_ref, eps_ref,
                  out_ref):
    act_dim = eps_ref.shape[-1]

    # ---- MLP trunk: bf16 x bf16 on the MXU, f32 accumulation (native single-pass path). ----
    x = obs_ref[...].astype(jnp.bfloat16)
    h = jnp.dot(x, w1_ref[...], preferred_element_type=jnp.float32) + b1_ref[...]
    h = jnp.maximum(h, 0.0)
    h = jnp.dot(h.astype(jnp.bfloat16), w2_ref[...],
                preferred_element_type=jnp.float32) + b2_ref[...]
    h = jnp.maximum(h, 0.0)

    # Fused mu | log_std head: one [H, 2*A] matmul, split by static lane slices.
    head = jnp.dot(h.astype(jnp.bfloat16), wh_ref[...],
                   preferred_element_type=jnp.float32) + bh_ref[...]
    mean = head[:, :act_dim]
    log_std = jnp.clip(head[:, act_dim:], LOG_STD_MIN, LOG_STD_MAX)
    std = jnp.exp(log_std)

    # Reparameterized sample through the tanh squash.
    eps = eps_ref[...]
    pre_tanh = mean + std * eps

    # Shared-exp tanh / log-Jacobian: a single EUP exp feeds both
    #   e             = exp(-2|x|)
    #   tanh(x)       = sign(x) * (1 - e) / (1 + e)
    #   softplus(-2x) = max(-2x, 0) + log(1 + e)
    #   log(1-tanh^2) = 2*(log2 - x - softplus(-2x))
    e = jnp.exp(-2.0 * jnp.abs(pre_tanh))
    one_plus_e = 1.0 + e
    inv = pl.reciprocal(one_plus_e, approx=True)   # EUP vrcp, rides its own bundle slot
    inv = inv * (2.0 - one_plus_e * inv)           # one Newton step -> ~f32 accurate
    sgn = jnp.where(pre_tanh >= 0.0, 1.0, -1.0)
    t = sgn * (1.0 - e) * inv
    pi = t * scale_ref[...] + bias_ref[...]

    # Normal log-prob at pre_tanh: (pre_tanh - mean) / std == eps exactly.
    log_normal = -0.5 * eps * eps - log_std - HALF_LOG_2PI
    softplus_z = jnp.maximum(-2.0 * pre_tanh, 0.0) + jnp.log(one_plus_e)
    log_det_jac = 2.0 * (LOG_2 - pre_tanh - softplus_z)
    logp = log_normal - log_det_jac

    # Single merged (TB, 2*A) store: one output DMA stream instead of two narrow ones.
    out_ref[...] = jnp.concatenate([pi, logp], axis=-1)


def stochastic_policy_forward(obs, params, eps, *, block_b=2048, force_even_grid=True):
    """Full policy forward pass: batch-tiled Pallas kernel + tiny wrapper reduction."""
    B, obs_dim = obs.shape
    hidden = params["w1"].shape[1]
    act_dim = params["whead"].shape[1] // 2

    # Divisor-style batch tiling: pick the number of tiles first, then round each tile
    # to a multiple of 8 -> pad waste < 8 rows per tile (not up to TB-1 like round_up(B,TB)).
    ntiles = max(pl.cdiv(B, block_b), 1)
    if force_even_grid and B >= 16:
        ntiles = max(ntiles, 2)        # v7x: don't leave the second TensorCore idle
        if ntiles % 2:
            ntiles += 1                # even step count -> even split across 2 TCs
    TB = _round_up(pl.cdiv(B, ntiles), 8)
    Bp = TB * ntiles
    if Bp != B:
        obs = jnp.pad(obs, ((0, Bp - B), (0, 0)))
        eps = jnp.pad(eps, ((0, Bp - B), (0, 0)))

    inputs = (obs, params["w1"], params["b1"], params["w2"], params["b2"],
              params["whead"], params["bhead"],
              params["action_scale"], params["action_bias"], eps)

    def batch_map(i):
        return (i, 0)

    def resident_map(i):       # weights/biases: same block every step -> stay in VMEM
        return (0, 0)

    # Single-buffer the resident weights once they are big enough to matter against
    # v7x's 64 MiB VMEM; tiny nets keep the default pipelining.
    resident_kwargs = {"pipeline_mode": pl.Buffered(1)} if hidden >= 1024 else {}

    in_specs = [pl.BlockSpec((TB, obs_dim), batch_map)]
    in_specs += [pl.BlockSpec(p.shape, resident_map, **resident_kwargs)
                 for p in inputs[1:-1]]
    in_specs += [pl.BlockSpec((TB, act_dim), batch_map)]
    out_specs = pl.BlockSpec((TB, 2 * act_dim), batch_map)

    param_bytes = sum(int(np.prod(p.shape)) * p.dtype.itemsize for p in inputs[1:-1])
    cost = pl.CostEstimate(
        flops=int(2 * Bp * (obs_dim * hidden + hidden * hidden + hidden * 2 * act_dim)
                  + 24 * Bp * act_dim),
        transcendentals=int(4 * Bp * act_dim),   # exp(log_std), exp(-2|x|), log, vrcp
        bytes_accessed=int(obs.nbytes + eps.nbytes + param_bytes
                           + Bp * 2 * act_dim * 4),
    )

    out = pl.pallas_call(
        policy_kernel,
        out_shape=jax.ShapeDtypeStruct((Bp, 2 * act_dim), jnp.float32),
        grid=(ntiles,),
        in_specs=in_specs,
        out_specs=out_specs,
        compiler_params=pltpu.CompilerParams(
            dimension_semantics=("parallel",),       # v7x: batch shards across both TCs
            vmem_limit_bytes=32 * 1024 * 1024),
        cost_estimate=cost,
    )(*inputs)

    pi = out[:B, :act_dim]
    log_pi = jnp.sum(out[:B, act_dim:], axis=-1, keepdims=True)
    return pi, log_pi


def make_params(key, obs_dim, hidden, act_dim, act_up, act_low,
                weight_dtype=jnp.bfloat16):
    # NOTE: for best MXU occupancy pick hidden as a multiple of 256 (v6e/v7x) / 128 (v5e).
    ks = jax.random.split(key, 4)

    def lin(k, fan_in, fan_out):
        bound = 1.0 / np.sqrt(fan_in)
        kw, kb = jax.random.split(k)
        w = jax.random.uniform(kw, (fan_in, fan_out), jnp.float32, -bound, bound)
        b = jax.random.uniform(kb, (1, fan_out), jnp.float32, -bound, bound)
        return w, b

    w1, b1 = lin(ks[0], obs_dim, hidden)
    w2, b2 = lin(ks[1], hidden, hidden)
    wmu, bmu = lin(ks[2], hidden, act_dim)
    wls, bls = lin(ks[3], hidden, act_dim)
    whead = jnp.concatenate([wmu, wls], axis=1)      # fused mu | log_std head
    bhead = jnp.concatenate([bmu, bls], axis=1)
    action_scale = (0.5 * (act_up - act_low)).reshape(1, act_dim).astype(jnp.float32)
    action_bias = (0.5 * (act_up + act_low)).reshape(1, act_dim).astype(jnp.float32)
    return dict(w1=w1.astype(weight_dtype), b1=b1,
                w2=w2.astype(weight_dtype), b2=b2,
                whead=whead.astype(weight_dtype), bhead=bhead,
                action_scale=action_scale, action_bias=action_bias)


def reference_forward(obs, p, eps):
    """Pure-JAX reference with the same bf16-in / f32-accumulate matmul precision."""
    act_dim = eps.shape[-1]

    def mm(x, w):
        return jnp.dot(x.astype(jnp.bfloat16), w, preferred_element_type=jnp.float32)

    h = jnp.maximum(mm(obs, p["w1"]) + p["b1"], 0.0)
    h = jnp.maximum(mm(h, p["w2"]) + p["b2"], 0.0)
    head = mm(h, p["whead"]) + p["bhead"]
    mean = head[:, :act_dim]
    log_std = jnp.clip(head[:, act_dim:], LOG_STD_MIN, LOG_STD_MAX)
    std = jnp.exp(log_std)
    pre_tanh = mean + std * eps
    t = jnp.tanh(pre_tanh)
    pi = t * p["action_scale"] + p["action_bias"]
    log_normal = -0.5 * eps * eps - log_std - HALF_LOG_2PI
    z = -2.0 * pre_tanh
    softplus_z = jnp.maximum(z, 0.0) + jnp.log(1.0 + jnp.exp(-jnp.abs(z)))
    log_det_jac = 2.0 * (LOG_2 - pre_tanh - softplus_z)
    log_pi = jnp.sum(log_normal - log_det_jac, axis=-1, keepdims=True)
    return pi, log_pi


if __name__ == "__main__":
    # Small but multi-tile shapes: block_b=32, B=96 -> 4 tiles of 24 rows (even grid for v7x).
    B, OBS_DIM, HIDDEN, ACT_DIM = 96, 16, 32, 6
    BLOCK_B = 32

    key = jax.random.PRNGKey(0)
    k_obs, k_eps, k_par = jax.random.split(key, 3)

    obs = jax.random.normal(k_obs, (B, OBS_DIM), dtype=jnp.float32)
    eps = jax.random.normal(k_eps, (B, ACT_DIM), dtype=jnp.float32)  # reparam noise
    # TODO(synk): eps could be generated in-kernel via pltpu.prng_seed/prng_random_bits to
    # drop the eps HBM stream; kept as an input so the run matches the pure-JAX reference.

    act_up = jnp.full((ACT_DIM,), 2.0, jnp.float32)
    act_low = jnp.full((ACT_DIM,), -1.0, jnp.float32)
    params = make_params(k_par, OBS_DIM, HIDDEN, ACT_DIM, act_up, act_low)

    forward = jax.jit(lambda o, p, e: stochastic_policy_forward(o, p, e, block_b=BLOCK_B))
    pi, log_pi = forward(obs, params, eps)
    jax.block_until_ready((pi, log_pi))

    pi_ref, log_pi_ref = reference_forward(obs, params, eps)
    np.testing.assert_allclose(np.asarray(pi), np.asarray(pi_ref), rtol=2e-3, atol=2e-3)
    np.testing.assert_allclose(np.asarray(log_pi), np.asarray(log_pi_ref), rtol=2e-3, atol=2e-3)

    assert pi.shape == (B, ACT_DIM) and log_pi.shape == (B, 1)
    print("KERNEL_OK")
</pallas_src>

<mosaic_0001>
module attributes {stable_mosaic.version = 11 : i64} {
  func.func @policy_kernel(%arg0: i32, %arg1: memref<24x16xf32, #tpu.memory_space<vmem>>, %arg2: memref<16x32xbf16, #tpu.memory_space<vmem>>, %arg3: memref<1x32xf32, #tpu.memory_space<vmem>>, %arg4: memref<32x32xbf16, #tpu.memory_space<vmem>>, %arg5: memref<1x32xf32, #tpu.memory_space<vmem>>, %arg6: memref<32x12xbf16, #tpu.memory_space<vmem>>, %arg7: memref<1x12xf32, #tpu.memory_space<vmem>>, %arg8: memref<1x6xf32, #tpu.memory_space<vmem>>, %arg9: memref<1x6xf32, #tpu.memory_space<vmem>>, %arg10: memref<24x6xf32, #tpu.memory_space<vmem>>, %arg11: memref<24x12xf32, #tpu.memory_space<vmem>>) attributes {dimension_semantics = [#tpu.dimension_semantics<parallel>], iteration_bounds = array<i64: 4>, scalar_prefetch = 0 : i64, scratch_operands = 0 : i64, tpu.core_type = #tpu.core_type<tc>, window_params = [{transform_indices = @transform_0, window_bounds = array<i64: 24, 16>}, {pipeline_mode = #tpu.pipeline_mode<synchronous>, transform_indices = @transform_1, window_bounds = array<i64: 16, 32>}, {pipeline_mode = #tpu.pipeline_mode<synchronous>, transform_indices = @transform_2, window_bounds = array<i64: 1, 32>}, {pipeline_mode = #tpu.pipeline_mode<synchronous>, transform_indices = @transform_3, window_bounds = array<i64: 32, 32>}, {pipeline_mode = #tpu.pipeline_mode<synchronous>, transform_indices = @transform_4, window_bounds = array<i64: 1, 32>}, {pipeline_mode = #tpu.pipeline_mode<synchronous>, transform_indices = @transform_5, window_bounds = array<i64: 32, 12>}, {pipeline_mode = #tpu.pipeline_mode<synchronous>, transform_indices = @transform_6, window_bounds = array<i64: 1, 12>}, {pipeline_mode = #tpu.pipeline_mode<synchronous>, transform_indices = @transform_7, window_bounds = array<i64: 1, 6>}, {pipeline_mode = #tpu.pipeline_mode<synchronous>, transform_indices = @transform_8, window_bounds = array<i64: 1, 6>}, {transform_indices = @transform_9, window_bounds = array<i64: 24, 6>}, {transform_indices = @transform_10, window_bounds = array<i64: 24, 12>}]} {
    %c0 = arith.constant 0 : index
    %c0_0 = arith.constant 0 : index
    %0 = vector.load %arg1[%c0, %c0_0] : memref<24x16xf32, #tpu.memory_space<vmem>>, vector<24x16xf32>
    %1 = arith.truncf %0 : vector<24x16xf32> to vector<24x16xbf16>
    %c0_1 = arith.constant 0 : index
    %c0_2 = arith.constant 0 : index
    %2 = vector.load %arg2[%c0_1, %c0_2] : memref<16x32xbf16, #tpu.memory_space<vmem>>, vector<16x32xbf16>
    %cst = arith.constant dense<0.000000e+00> : vector<24x32xf32>
    %3 = tpu.matmul %1, %2, %cst {dimension_numbers = #tpu.dot_dimension_numbers<[1], [0], [0], [1], [0, 0, 1, 1], [], []>} : vector<24x16xbf16>, vector<16x32xbf16>, vector<24x32xf32> -> vector<24x32xf32>
    %c0_3 = arith.constant 0 : index
    %c0_4 = arith.constant 0 : index
    %4 = vector.load %arg3[%c0_3, %c0_4] : memref<1x32xf32, #tpu.memory_space<vmem>>, vector<1x32xf32>
    %5 = vector.broadcast %4 : vector<1x32xf32> to vector<24x32xf32>
    %6 = arith.addf %3, %5 : vector<24x32xf32>
    %cst_5 = arith.constant 0.000000e+00 : f32
    %7 = vector.broadcast %cst_5 : f32 to vector<24x32xf32>
    %8 = arith.maximumf %6, %7 : vector<24x32xf32>
    %9 = arith.truncf %8 : vector<24x32xf32> to vector<24x32xbf16>
    %c0_6 = arith.constant 0 : index
    %c0_7 = arith.constant 0 : index
    %10 = vector.load %arg4[%c0_6, %c0_7] : memref<32x32xbf16, #tpu.memory_space<vmem>>, vector<32x32xbf16>
    %cst_8 = arith.constant dense<0.000000e+00> : vector<24x32xf32>
    %11 = tpu.matmul %9, %10, %cst_8 {dimension_numbers = #tpu.dot_dimension_numbers<[1], [0], [0], [1], [0, 0, 1, 1], [], []>} : vector<24x32xbf16>, vector<32x32xbf16>, vector<24x32xf32> -> vector<24x32xf32>
    %c0_9 = arith.constant 0 : index
    %c0_10 = arith.constant 0 : index
    %12 = vector.load %arg5[%c0_9, %c0_10] : memref<1x32xf32, #tpu.memory_space<vmem>>, vector<1x32xf32>
    %13 = vector.broadcast %12 : vector<1x32xf32> to vector<24x32xf32>
    %14 = arith.addf %11, %13 : vector<24x32xf32>
    %cst_11 = arith.constant 0.000000e+00 : f32
    %15 = vector.broadcast %cst_11 : f32 to vector<24x32xf32>
    %16 = arith.maximumf %14, %15 : vector<24x32xf32>
    %17 = arith.truncf %16 : vector<24x32xf32> to vector<24x32xbf16>
    %c0_12 = arith.constant 0 : index
    %c0_13 = arith.constant 0 : index
    %18 = vector.load %arg6[%c0_12, %c0_13] : memref<32x12xbf16, #tpu.memory_space<vmem>>, vector<32x12xbf16>
    %cst_14 = arith.constant dense<0.000000e+00> : vector<24x12xf32>
    %19 = tpu.matmul %17, %18, %cst_14 {dimension_numbers = #tpu.dot_dimension_numbers<[1], [0], [0], [1], [0, 0, 1, 1], [], []>} : vector<24x32xbf16>, vector<32x12xbf16>, vector<24x12xf32> -> vector<24x12xf32>
    %c0_15 = arith.constant 0 : index
    %c0_16 = arith.constant 0 : index
    %20 = vector.load %arg7[%c0_15, %c0_16] : memref<1x12xf32, #tpu.memory_space<vmem>>, vector<1x12xf32>
    %21 = vector.broadcast %20 : vector<1x12xf32> to vector<24x12xf32>
    %22 = arith.addf %19, %21 : vector<24x12xf32>
    %23 = vector.extract_strided_slice %22 {offsets = [0, 0], sizes = [24, 6], strides = [1, 1]} : vector<24x12xf32> to vector<24x6xf32>
    %24 = vector.extract_strided_slice %22 {offsets = [0, 6], sizes = [24, 6], strides = [1, 1]} : vector<24x12xf32> to vector<24x6xf32>
    %cst_17 = arith.constant -2.000000e+01 : f32
    %cst_18 = arith.constant 2.000000e+00 : f32
    %25 = vector.broadcast %cst_17 : f32 to vector<24x6xf32>
    %26 = arith.maximumf %25, %24 : vector<24x6xf32>
    %27 = vector.broadcast %cst_18 : f32 to vector<24x6xf32>
    %28 = arith.minimumf %27, %26 : vector<24x6xf32>
    %29 = math.exp %28 : vector<24x6xf32>
    %c0_19 = arith.constant 0 : index
    %c0_20 = arith.constant 0 : index
    %30 = vector.load %arg10[%c0_19, %c0_20] : memref<24x6xf32, #tpu.memory_space<vmem>>, vector<24x6xf32>
    %31 = arith.mulf %29, %30 : vector<24x6xf32>
    %32 = arith.addf %23, %31 : vector<24x6xf32>
    %33 = math.absf %32 : vector<24x6xf32>
    %cst_21 = arith.constant -2.000000e+00 : f32
    %34 = vector.broadcast %cst_21 : f32 to vector<24x6xf32>
    %35 = arith.mulf %34, %33 : vector<24x6xf32>
    %36 = math.exp %35 : vector<24x6xf32>
    %cst_22 = arith.constant 1.000000e+00 : f32
    %37 = vector.broadcast %cst_22 : f32 to vector<24x6xf32>
    %38 = arith.addf %37, %36 : vector<24x6xf32>
    %39 = tpu.reciprocal %38 {approx = true} : vector<24x6xf32> -> vector<24x6xf32>
    %40 = arith.mulf %38, %39 : vector<24x6xf32>
    %cst_23 = arith.constant 2.000000e+00 : f32
    %41 = vector.broadcast %cst_23 : f32 to vector<24x6xf32>
    %42 = arith.subf %41, %40 : vector<24x6xf32>
    %43 = arith.mulf %39, %42 : vector<24x6xf32>
    %cst_24 = arith.constant 0.000000e+00 : f32
    %44 = vector.broadcast %cst_24 : f32 to vector<24x6xf32>
    %45 = arith.cmpf oge, %32, %44 : vector<24x6xf32>
    %cst_25 = arith.constant 1.000000e+00 : f32
    %cst_26 = arith.constant -1.000000e+00 : f32
    %46 = vector.broadcast %cst_25 : f32 to vector<24x6xf32>
    %47 = vector.broadcast %cst_26 : f32 to vector<24x6xf32>
    %48 = arith.select %45, %46, %47 : vector<24x6xi1>, vector<24x6xf32>
    %cst_27 = arith.constant 1.000000e+00 : f32
    %49 = vector.broadcast %cst_27 : f32 to vector<24x6xf32>
    %50 = arith.subf %49, %36 : vector<24x6xf32>
    %51 = arith.mulf %48, %50 : vector<24x6xf32>
    %52 = arith.mulf %51, %43 : vector<24x6xf32>
    %c0_28 = arith.constant 0 : index
    %c0_29 = arith.constant 0 : index
    %53 = vector.load %arg8[%c0_28, %c0_29] : memref<1x6xf32, #tpu.memory_space<vmem>>, vector<1x6xf32>
    %54 = vector.broadcast %53 : vector<1x6xf32> to vector<24x6xf32>
    %55 = arith.mulf %52, %54 : vector<24x6xf32>
    %c0_30 = arith.constant 0 : index
    %c0_31 = arith.constant 0 : index
    %56 = vector.load %arg9[%c0_30, %c0_31] : memref<1x6xf32, #tpu.memory_space<vmem>>, vector<1x6xf32>
    %57 = vector.broadcast %56 : vector<1x6xf32> to vector<24x6xf32>
    %58 = arith.addf %55, %57 : vector<24x6xf32>
    %cst_32 = arith.constant -5.000000e-01 : f32
    %59 = vector.broadcast %cst_32 : f32 to vector<24x6xf32>
    %60 = arith.mulf %59, %30 : vector<24x6xf32>
    %61 = arith.mulf %60, %30 : vector<24x6xf32>
    %62 = arith.subf %61, %28 : vector<24x6xf32>
    %cst_33 = arith.constant 0.918938517 : f32
    %63 = vector.broadcast %cst_33 : f32 to vector<24x6xf32>
    %64 = arith.subf %62, %63 : vector<24x6xf32>
    %cst_34 = arith.constant -2.000000e+00 : f32
    %65 = vector.broadcast %cst_34 : f32 to vector<24x6xf32>
    %66 = arith.mulf %65, %32 : vector<24x6xf32>
    %cst_35 = arith.constant 0.000000e+00 : f32
    %67 = vector.broadcast %cst_35 : f32 to vector<24x6xf32>
    %68 = arith.maximumf %66, %67 : vector<24x6xf32>
    %69 = math.log %38 : vector<24x6xf32>
    %70 = arith.addf %68, %69 : vector<24x6xf32>
    %cst_36 = arith.constant 0.693147182 : f32
    %71 = vector.broadcast %cst_36 : f32 to vector<24x6xf32>
    %72 = arith.subf %71, %32 : vector<24x6xf32>
    %73 = arith.subf %72, %70 : vector<24x6xf32>
    %cst_37 = arith.constant 2.000000e+00 : f32
    %74 = vector.broadcast %cst_37 : f32 to vector<24x6xf32>
    %75 = arith.mulf %74, %73 : vector<24x6xf32>
    %76 = arith.subf %64, %75 : vector<24x6xf32>
    %77 = tpu.concatenate %58, %76 in 1 : vector<24x6xf32>, vector<24x6xf32> -> vector<24x12xf32>
    %c0_38 = arith.constant 0 : index
    %c0_39 = arith.constant 0 : index
    %78 = vector.load %arg11[%c0_38, %c0_39] : memref<24x12xf32, #tpu.memory_space<vmem>>, vector<24x12xf32>
    tpu.vector_store %arg11[%c0_38, %c0_39], %77 {strides = array<i32>} : memref<24x12xf32, #tpu.memory_space<vmem>>, vector<24x12xf32>,
    return
  }
  func.func @transform_0(%arg0: i32) -> (i32, i32) {
    %c0_i32 = arith.constant 0 : i32
    %c0_i32_0 = arith.constant 0 : i32
    return %arg0, %c0_i32 : i32, i32
  }
  func.func @transform_1(%arg0: i32) -> (i32, i32) {
    %c0_i32 = arith.constant 0 : i32
    %c0_i32_0 = arith.constant 0 : i32
    %c0_i32_1 = arith.constant 0 : i32
    return %c0_i32, %c0_i32_0 : i32, i32
  }
  func.func @transform_2(%arg0: i32) -> (i32, i32) {
    %c0_i32 = arith.constant 0 : i32
    %c0_i32_0 = arith.constant 0 : i32
    %c0_i32_1 = arith.constant 0 : i32
    return %c0_i32, %c0_i32_0 : i32, i32
  }
  func.func @transform_3(%arg0: i32) -> (i32, i32) {
    %c0_i32 = arith.constant 0 : i32
    %c0_i32_0 = arith.constant 0 : i32
    %c0_i32_1 = arith.constant 0 : i32
    return %c0_i32, %c0_i32_0 : i32, i32
  }
  func.func @transform_4(%arg0: i32) -> (i32, i32) {
    %c0_i32 = arith.constant 0 : i32
    %c0_i32_0 = arith.constant 0 : i32
    %c0_i32_1 = arith.constant 0 : i32
    return %c0_i32, %c0_i32_0 : i32, i32
  }
  func.func @transform_5(%arg0: i32) -> (i32, i32) {
    %c0_i32 = arith.constant 0 : i32
    %c0_i32_0 = arith.constant 0 : i32
    %c0_i32_1 = arith.constant 0 : i32
    return %c0_i32, %c0_i32_0 : i32, i32
  }
  func.func @transform_6(%arg0: i32) -> (i32, i32) {
    %c0_i32 = arith.constant 0 : i32
    %c0_i32_0 = arith.constant 0 : i32
    %c0_i32_1 = arith.constant 0 : i32
    return %c0_i32, %c0_i32_0 : i32, i32
  }
  func.func @transform_7(%arg0: i32) -> (i32, i32) {
    %c0_i32 = arith.constant 0 : i32
    %c0_i32_0 = arith.constant 0 : i32
    %c0_i32_1 = arith.constant 0 : i32
    return %c0_i32, %c0_i32_0 : i32, i32
  }
  func.func @transform_8(%arg0: i32) -> (i32, i32) {
    %c0_i32 = arith.constant 0 : i32
    %c0_i32_0 = arith.constant 0 : i32
    %c0_i32_1 = arith.constant 0 : i32
    return %c0_i32, %c0_i32_0 : i32, i32
  }
  func.func @transform_9(%arg0: i32) -> (i32, i32) {
    %c0_i32 = arith.constant 0 : i32
    %c0_i32_0 = arith.constant 0 : i32
    return %arg0, %c0_i32 : i32, i32
  }
  func.func @transform_10(%arg0: i32) -> (i32, i32) {
    %c0_i32 = arith.constant 0 : i32
    %c0_i32_0 = arith.constant 0 : i32
    return %arg0, %c0_i32 : i32, i32
  }
}

</mosaic_0001>

<llo_original>
// kernel: _lambda_.1
$region0: #{_lambda_.1}
  #allocation0 [shape = 'u32[]', space=smem, size = 0x4, offset = 0x4, fixed_abs, tag = 'smem constant byte address 0x4 - core index']
  #allocation1 [shape = 'u32[144,128]{1,0:T(1,128)}', space=vmem, size = 0x12000, scoped, tag = 'internal scratch']
  %s0 = inlined_call_operand.vmem [shape: f32[96,16], index: 0, kind: input, shape index: {}]
  %s1 = inlined_call_operand.vmem [shape: bf16[16,32], index: 1, kind: input, shape index: {}]
  %s2 = inlined_call_operand.vmem [shape: f32[1,32], index: 2, kind: input, shape index: {}]
  %s3 = inlined_call_operand.vmem [shape: bf16[32,32], index: 3, kind: input, shape index: {}]
  %s4 = inlined_call_operand.vmem [shape: f32[1,32], index: 4, kind: input, shape index: {}]
  %s5 = inlined_call_operand.vmem [shape: bf16[32,12], index: 5, kind: input, shape index: {}]
  %s6 = inlined_call_operand.vmem [shape: f32[1,12], index: 6, kind: input, shape index: {}]
  %s7 = inlined_call_operand.vmem [shape: f32[1,6], index: 7, kind: input, shape index: {}]
  %s8 = inlined_call_operand.vmem [shape: f32[1,6], index: 8, kind: input, shape index: {}]
  %s9 = inlined_call_operand.vmem [shape: f32[96,6], index: 9, kind: input, shape index: {}]
  %s10 = inlined_call_operand.vmem [shape: f32[96,12], index: 10, kind: output, shape index: {}]
  %s11 = sld [smem:[#allocation0]]
  $region73: #{_lambda_.1} parent=0
    _
  %s13 = ssub.s32 1, %s11
  %s14 = scalar_select 0, %s13, %s11
  loop: start=0, step=1, limit=6
  $region2: #{_lambda_.1} parent=0 // loop_pre_header
    _
  $region3: #{_lambda_.1} parent=0 // loop_header
    %s16 = sphi 0, %s20
    %p17 = scmp.ge.s32.totalorder %s16, 6
    %s26 = sphi 0, %s28
    %s29 = sphi 0, %s26
    %s30 = sphi 0, %s29
    %s46 = sphi 0, %s30
    %s50 = sphi 0, %s50
    %s52 = sphi 0, %s50
    %s53 = sphi 0, %s52
    %s67 = sphi 0, %s53
    %s71 = sphi 0, %s71
    %s73 = sphi 0, %s71
    %s74 = sphi 0, %s73
    %s88 = sphi 0, %s74
    %s92 = sphi 0, %s92
    %s94 = sphi 0, %s92
    %s95 = sphi 0, %s94
    %s109 = sphi 0, %s95
    %s113 = sphi 0, %s113
    %s115 = sphi 0, %s113
    %s116 = sphi 0, %s115
    %s130 = sphi 0, %s116
    %s134 = sphi 0, %s134
    %s136 = sphi 0, %s134
    %s137 = sphi 0, %s136
    %s151 = sphi 0, %s137
    %s155 = sphi 0, %s155
    %s157 = sphi 0, %s155
    %s158 = sphi 0, %s157
    %s172 = sphi 0, %s158
    %s176 = sphi 0, %s176
    %s178 = sphi 0, %s176
    %s179 = sphi 0, %s178
    %s193 = sphi 0, %s179
    %s197 = sphi 0, %s197
    %s199 = sphi 0, %s197
    %s200 = sphi 0, %s199
    %s214 = sphi 0, %s200
    %s220 = sphi 0, %s222
    %s223 = sphi 0, %s220
    %s224 = sphi 0, %s223
    %s240 = sphi 0, %s224
    %s246 = sphi 0, %s248
    %s249 = sphi 0, %s246
    %s250 = sphi 0, %s249
    %s266 = sphi 0, %s250
  $region4: #{_lambda_.1} parent=0 // loop_header_branch
    %19 = sbr.rel (%p17) target = $region8
  $region5: #{_lambda_.1} parent=0 // loop_body
    %s21 = ssub.s32 %s16, 1
    %s22 = ssub.s32 %s16, 2
    %s23 = sadd.s32 %s16, 1
    %s24 = ssub.s32 %s16, %s23
    %p25 = scmp.eq.s32.totalorder %s24, 0
    %s27 = sadd.s32 %s26, 1
    %s28 = scalar_select %p25, %s26, %s27
    %p31 = pneg %p25
    %p32 = scmp.eq.s32.totalorder %s16, 3
    %p33 = por %p31, %p32
    %p34 = scmp.ne.s32.totalorder %s26, %s29
    %p35 = scmp.eq.s32.totalorder %s16, 0
    %p36 = por %p34, %p35
    %p37 = scmp.ne.s32.totalorder %s26, %s29
    %p38 = scmp.eq.s32.totalorder %s21, 3
    %p39 = por %p37, %p38
    %p40 = scmp.ne.s32.totalorder %s29, %s30
    %p41 = scmp.eq.s32.totalorder %s21, 0
    %p42 = por %p40, %p41
    %p43 = scmp.ne.s32.totalorder %s29, %s30
    %p44 = scmp.eq.s32.totalorder %s22, 3
    %p45 = por %p43, %p44
    %p47 = scmp.ne.s32.totalorder %s30, %s46
    %p48 = scmp.eq.s32.totalorder %s22, 0
    %p49 = por %p47, %p48
    %s51 = sadd.s32 %s50, 1
    %p54 = scmp.eq.s32.totalorder %s16, 3
    %p55 = scmp.ne.s32.totalorder %s50, %s52
    %p56 = scmp.eq.s32.totalorder %s16, 0
    %p57 = por %p55, %p56
    %p58 = scmp.ne.s32.totalorder %s50, %s52
    %p59 = scmp.eq.s32.totalorder %s21, 3
    %p60 = por %p58, %p59
    %p61 = scmp.ne.s32.totalorder %s52, %s53
    %p62 = scmp.eq.s32.totalorder %s21, 0
    %p63 = por %p61, %p62
    %p64 = scmp.ne.s32.totalorder %s52, %s53
    %p65 = scmp.eq.s32.totalorder %s22, 3
    %p66 = por %p64, %p65
    %p68 = scmp.ne.s32.totalorder %s53, %s67
    %p69 = scmp.eq.s32.totalorder %s22, 0
    %p70 = por %p68, %p69
    %s72 = sadd.s32 %s71, 1
    %p75 = scmp.eq.s32.totalorder %s16, 3
    %p76 = scmp.ne.s32.totalorder %s71, %s73
    %p77 = scmp.eq.s32.totalorder %s16, 0
    %p78 = por %p76, %p77
    %p79 = scmp.ne.s32.totalorder %s71, %s73
    %p80 = scmp.eq.s32.totalorder %s21, 3
    %p81 = por %p79, %p80
    %p82 = scmp.ne.s32.totalorder %s73, %s74
    %p83 = scmp.eq.s32.totalorder %s21, 0
    %p84 = por %p82, %p83
    %p85 = scmp.ne.s32.totalorder %s73, %s74
    %p86 = scmp.eq.s32.totalorder %s22, 3
    %p87 = por %p85, %p86
    %p89 = scmp.ne.s32.totalorder %s74, %s88
    %p90 = scmp.eq.s32.totalorder %s22, 0
    %p91 = por %p89, %p90
    %s93 = sadd.s32 %s92, 1
    %p96 = scmp.eq.s32.totalorder %s16, 3
    %p97 = scmp.ne.s32.totalorder %s92, %s94
    %p98 = scmp.eq.s32.totalorder %s16, 0
    %p99 = por %p97, %p98
    %p100 = scmp.ne.s32.totalorder %s92, %s94
    %p101 = scmp.eq.s32.totalorder %s21, 3
    %p102 = por %p100, %p101
    %p103 = scmp.ne.s32.totalorder %s94, %s95
    %p104 = scmp.eq.s32.totalorder %s21, 0
    %p105 = por %p103, %p104
    %p106 = scmp.ne.s32.totalorder %s94, %s95
    %p107 = scmp.eq.s32.totalorder %s22, 3
    %p108 = por %p106, %p107
    %p110 = scmp.ne.s32.totalorder %s95, %s109
    %p111 = scmp.eq.s32.totalorder %s22, 0
    %p112 = por %p110, %p111
    %s114 = sadd.s32 %s113, 1
    %p117 = scmp.eq.s32.totalorder %s16, 3
    %p118 = scmp.ne.s32.totalorder %s113, %s115
    %p119 = scmp.eq.s32.totalorder %s16, 0
    %p120 = por %p118, %p119
    %p121 = scmp.ne.s32.totalorder %s113, %s115
    %p122 = scmp.eq.s32.totalorder %s21, 3
    %p123 = por %p121, %p122
    %p124 = scmp.ne.s32.totalorder %s115, %s116
    %p125 = scmp.eq.s32.totalorder %s21, 0
    %p126 = por %p124, %p125
    %p127 = scmp.ne.s32.totalorder %s115, %s116
    %p128 = scmp.eq.s32.totalorder %s22, 3
    %p129 = por %p127, %p128
    %p131 = scmp.ne.s32.totalorder %s116, %s130
    %p132 = scmp.eq.s32.totalorder %s22, 0
    %p133 = por %p131, %p132
    %s135 = sadd.s32 %s134, 1
    %p138 = scmp.eq.s32.totalorder %s16, 3
    %p139 = scmp.ne.s32.totalorder %s134, %s136
    %p140 = scmp.eq.s32.totalorder %s16, 0
    %p141 = por %p139, %p140
    %p142 = scmp.ne.s32.totalorder %s134, %s136
    %p143 = scmp.eq.s32.totalorder %s21, 3
    %p144 = por %p142, %p143
    %p145 = scmp.ne.s32.totalorder %s136, %s137
    %p146 = scmp.eq.s32.totalorder %s21, 0
    %p147 = por %p145, %p146
    %p148 = scmp.ne.s32.totalorder %s136, %s137
    %p149 = scmp.eq.s32.totalorder %s22, 3
    %p150 = por %p148, %p149
    %p152 = scmp.ne.s32.totalorder %s137, %s151
    %p153 = scmp.eq.s32.totalorder %s22, 0
    %p154 = por %p152, %p153
    %s156 = sadd.s32 %s155, 1
    %p159 = scmp.eq.s32.totalorder %s16, 3
    %p160 = scmp.ne.s32.totalorder %s155, %s157
    %p161 = scmp.eq.s32.totalorder %s16, 0
    %p162 = por %p160, %p161
    %p163 = scmp.ne.s32.totalorder %s155, %s157
    %p164 = scmp.eq.s32.totalorder %s21, 3
    %p165 = por %p163, %p164
    %p166 = scmp.ne.s32.totalorder %s157, %s158
    %p167 = scmp.eq.s32.totalorder %s21, 0
    %p168 = por %p166, %p167
    %p169 = scmp.ne.s32.totalorder %s157, %s158
    %p170 = scmp.eq.s32.totalorder %s22, 3
    %p171 = por %p169, %p170
    %p173 = scmp.ne.s32.totalorder %s158, %s172
    %p174 = scmp.eq.s32.totalorder %s22, 0
    %p175 = por %p173, %p174
    %s177 = sadd.s32 %s176, 1
    %p180 = scmp.eq.s32.totalorder %s16, 3
    %p181 = scmp.ne.s32.totalorder %s176, %s178
    %p182 = scmp.eq.s32.totalorder %s16, 0
    %p183 = por %p181, %p182
    %p184 = scmp.ne.s32.totalorder %s176, %s178
    %p185 = scmp.eq.s32.totalorder %s21, 3
    %p186 = por %p184, %p185
    %p187 = scmp.ne.s32.totalorder %s178, %s179
    %p188 = scmp.eq.s32.totalorder %s21, 0
    %p189 = por %p187, %p188
    %p190 = scmp.ne.s32.totalorder %s178, %s179
    %p191 = scmp.eq.s32.totalorder %s22, 3
    %p192 = por %p190, %p191
    %p194 = scmp.ne.s32.totalorder %s179, %s193
    %p195 = scmp.eq.s32.totalorder %s22, 0
    %p196 = por %p194, %p195
    %s198 = sadd.s32 %s197, 1
    %p201 = scmp.eq.s32.totalorder %s16, 3
    %p202 = scmp.ne.s32.totalorder %s197, %s199
    %p203 = scmp.eq.s32.totalorder %s16, 0
    %p204 = por %p202, %p203
    %p205 = scmp.ne.s32.totalorder %s197, %s199
    %p206 = scmp.eq.s32.totalorder %s21, 3
    %p207 = por %p205, %p206
    %p208 = scmp.ne.s32.totalorder %s199, %s200
    %p209 = scmp.eq.s32.totalorder %s21, 0
    %p210 = por %p208, %p209
    %p211 = scmp.ne.s32.totalorder %s199, %s200
    %p212 = scmp.eq.s32.totalorder %s22, 3
    %p213 = por %p211, %p212
    %p215 = scmp.ne.s32.totalorder %s200, %s214
    %p216 = scmp.eq.s32.totalorder %s22, 0
    %p217 = por %p215, %p216
    %s218 = ssub.s32 %s16, %s23
    %p219 = scmp.eq.s32.totalorder %s218, 0
    %s221 = sadd.s32 %s220, 1
    %s222 = scalar_select %p219, %s220, %s221
    %p225 = pneg %p219
    %p226 = scmp.eq.s32.totalorder %s16, 3
    %p227 = por %p225, %p226
    %p228 = scmp.ne.s32.totalorder %s220, %s223
    %p229 = scmp.eq.s32.totalorder %s16, 0
    %p230 = por %p228, %p229
    %p231 = scmp.ne.s32.totalorder %s220, %s223
    %p232 = scmp.eq.s32.totalorder %s21, 3
    %p233 = por %p231, %p232
    %p234 = scmp.ne.s32.totalorder %s223, %s224
    %p235 = scmp.eq.s32.totalorder %s21, 0
    %p236 = por %p234, %p235
    %p237 = scmp.ne.s32.totalorder %s223, %s224
    %p238 = scmp.eq.s32.totalorder %s22, 3
    %p239 = por %p237, %p238
    %p241 = scmp.ne.s32.totalorder %s224, %s240
    %p242 = scmp.eq.s32.totalorder %s22, 0
    %p243 = por %p241, %p242
    %s244 = ssub.s32 %s16, %s23
    %p245 = scmp.eq.s32.totalorder %s244, 0
    %s247 = sadd.s32 %s246, 1
    %s248 = scalar_select %p245, %s246, %s247
    %p251 = pneg %p245
    %p252 = scmp.eq.s32.totalorder %s16, 3
    %p253 = por %p251, %p252
    %p254 = scmp.ne.s32.totalorder %s246, %s249
    %p255 = scmp.eq.s32.totalorder %s16, 0
    %p256 = por %p254, %p255
    %p257 = scmp.ne.s32.totalorder %s246, %s249
    %p258 = scmp.eq.s32.totalorder %s21, 3
    %p259 = por %p257, %p258
    %p260 = scmp.ne.s32.totalorder %s249, %s250
    %p261 = scmp.eq.s32.totalorder %s21, 0
    %p262 = por %p260, %p261
    %p263 = scmp.ne.s32.totalorder %s249, %s250
    %p264 = scmp.eq.s32.totalorder %s22, 3
    %p265 = por %p263, %p264
    %p267 = scmp.ne.s32.totalorder %s250, %s266
    %p268 = scmp.eq.s32.totalorder %s22, 0
    %p269 = por %p267, %p268
    %p270 = scmp.le.s32.totalorder 1, %s16
    %p271 = scmp.lt.s32.totalorder %s16, 5
    %p272 = pnand %p270, %p271
    %p273 = pneg %p272
    // Predicated region
    $region9: #{_lambda_.1} parent=5 // pred_check
      _
    $region10: #{_lambda_.1} parent=5 // pred_check_branch
      %275 = sbr.rel (%p272) target = $region12
    $region11: #{_lambda_.1} parent=5 // pred_region
      %s276 = ssub.s32 %s16, 1
      // Predicated region
      $region13: #{_lambda_.1} parent=11 // pred_check
        %p277 = pneg %p63
      $region14: #{_lambda_.1} parent=11 // pred_check_branch
        %279 = sbr.rel (%p277) target = $region16
      $region15: #{_lambda_.1} parent=11 // pred_region
        _
      $region16: #{_lambda_.1} parent=11 // pred_fallthru
        _
      // Predicated region
      $region17: #{_lambda_.1} parent=11 // pred_check
        %p280 = pneg %p84
      $region18: #{_lambda_.1} parent=11 // pred_check_branch
        %282 = sbr.rel (%p280) target = $region20
      $region19: #{_lambda_.1} parent=11 // pred_region
        _
      $region20: #{_lambda_.1} parent=11 // pred_fallthru
        _
      // Predicated region
      $region21: #{_lambda_.1} parent=11 // pred_check
        %p283 = pneg %p105
      $region22: #{_lambda_.1} parent=11 // pred_check_branch
        %285 = sbr.rel (%p283) target = $region24
      $region23: #{_lambda_.1} parent=11 // pred_region
        _
      $region24: #{_lambda_.1} parent=11 // pred_fallthru
        _
      // Predicated region
      $region25: #{_lambda_.1} parent=11 // pred_check
        %p286 = pneg %p126
      $region26: #{_lambda_.1} parent=11 // pred_check_branch
        %288 = sbr.rel (%p286) target = $region28
      $region27: #{_lambda_.1} parent=11 // pred_region
        _
      $region28: #{_lambda_.1} parent=11 // pred_fallthru
        _
      // Predicated region
      $region29: #{_lambda_.1} parent=11 // pred_check
        %p289 = pneg %p147
      $region30: #{_lambda_.1} parent=11 // pred_check_branch
        %291 = sbr.rel (%p289) target = $region32
      $region31: #{_lambda_.1} parent=11 // pred_region
        _
      $region32: #{_lambda_.1} parent=11 // pred_fallthru
        _
      // Predicated region
      $region33: #{_lambda_.1} parent=11 // pred_check
        %p292 = pneg %p168
      $region34: #{_lambda_.1} parent=11 // pred_check_branch
        %294 = sbr.rel (%p292) target = $region36
      $region35: #{_lambda_.1} parent=11 // pred_region
        _
      $region36: #{_lambda_.1} parent=11 // pred_fallthru
        _
      // Predicated region
      $region37: #{_lambda_.1} parent=11 // pred_check
        %p295 = pneg %p189
      $region38: #{_lambda_.1} parent=11 // pred_check_branch
        %297 = sbr.rel (%p295) target = $region40
      $region39: #{_lambda_.1} parent=11 // pred_region
        _
      $region40: #{_lambda_.1} parent=11 // pred_fallthru
        _
      // Predicated region
      $region41: #{_lambda_.1} parent=11 // pred_check
        %p298 = pneg %p210
      $region42: #{_lambda_.1} parent=11 // pred_check_branch
        %300 = sbr.rel (%p298) target = $region44
      $region43: #{_lambda_.1} parent=11 // pred_region
        _
      $region44: #{_lambda_.1} parent=11 // pred_fallthru
        _
    $region12: #{_lambda_.1} parent=5 // pred_fallthru
      _
    %p301 = scmp.lt.s32.totalorder %s16, 4
    // Predicated region
    $region45: #{_lambda_.1} parent=5 // pred_check
      %p302 = pneg %p301
    $region46: #{_lambda_.1} parent=5 // pred_check_branch
      %304 = sbr.rel (%p302) target = $region48
    $region47: #{_lambda_.1} parent=5 // pred_region
      // Predicated region
      $region49: #{_lambda_.1} parent=47 // pred_check
        %p305 = pneg %p36
      $region50: #{_lambda_.1} parent=47 // pred_check_branch
        %307 = sbr.rel (%p305) target = $region52
      $region51: #{_lambda_.1} parent=47 // pred_region
        %s308 = smul.u32 3, %s16
        %p309 = scmp.lt.s32.totalorder %s308, 11
        %s310 = scalar_select %p309, %s308, 11
        %s311 = smul.addr %s310, 8
        %s312 = scalar_lea.vmem %s0, %s311
        %s313 = smul.u32 3, %s16
      $region52: #{_lambda_.1} parent=47 // pred_fallthru
        _
      // Predicated region
      $region53: #{_lambda_.1} parent=47 // pred_check
        %p314 = pneg %p230
      $region54: #{_lambda_.1} parent=47 // pred_check_branch
        %316 = sbr.rel (%p314) target = $region56
      $region55: #{_lambda_.1} parent=47 // pred_region
        %s317 = smul.u32 3, %s16
        %p318 = scmp.lt.s32.totalorder %s317, 11
        %s319 = scalar_select %p318, %s317, 11
        %s320 = smul.addr %s319, 8
        %s321 = scalar_lea.vmem %s9, %s320
        %s322 = smul.u32 3, %s16
      $region56: #{_lambda_.1} parent=47 // pred_fallthru
        _
    $region48: #{_lambda_.1} parent=5 // pred_fallthru
      _
    %p323 = scmp.le.s32.totalorder 1, %s16
    %p324 = scmp.lt.s32.totalorder %s16, 5
    %p325 = pnand %p323, %p324
    %p326 = pneg %p325
    // Predicated region
    $region57: #{_lambda_.1} parent=5 // pred_check
      _
    $region58: #{_lambda_.1} parent=5 // pred_check_branch
      %328 = sbr.rel (%p325) target = $region60
    $region59: #{_lambda_.1} parent=5 // pred_region
      %s329 = ssub.s32 %s16, 1
      %s330 = smul.u32 3, %s21
      %p331 = scmp.lt.s32.totalorder %s330, 11
      %s332 = scalar_select %p331, %s330, 11
      %s333 = smul.addr %s332, 8
      %s334 = scalar_lea.vmem %s0, %s333
      %p335 = pneg %p42
      %p336 = pneg %p39
      %p337 = pneg %p63
      %p338 = pneg %p60
      %p339 = pneg %p84
      %p340 = pneg %p81
      %p341 = pneg %p105
      %p342 = pneg %p102
      %p343 = pneg %p126
      %p344 = pneg %p123
      %p345 = pneg %p147
      %p346 = pneg %p144
      %p347 = pneg %p168
      %p348 = pneg %p165
      %p349 = pneg %p189
      %p350 = pneg %p186
      %p351 = pneg %p210
      %p352 = pneg %p207
      %s353 = smul.u32 3, %s21
      %p354 = scmp.lt.s32.totalorder %s353, 11
      %s355 = scalar_select %p354, %s353, 11
      %s356 = smul.addr %s355, 8
      %s357 = scalar_lea.vmem %s9, %s356
      %p358 = pneg %p236
      %p359 = pneg %p233
      %p360 = pneg %p262
      %p361 = pneg %p259
      %s362 = smul.u32 3, %s21
      %p363 = scmp.lt.s32.totalorder %s362, 11
      %s364 = scalar_select %p363, %s362, 11
      %s365 = smul.addr %s364, 8
      %s366 = scalar_lea.vmem %s10, %s365
      %s367 = smul.u32 3, %s21
      %p368 = scmp.lt.s32.totalorder %s367, 11
      %s369 = scalar_select %p368, %s367, 11
      %s370 = smul.addr %s369, 8
      %s371 = scalar_lea.vmem %s0, %s370
      %s372 = smul.u32 3, %s21
      %s373 = smul.u32 3, %s21
      %p374 = scmp.lt.s32.totalorder %s373, 11
      %s375 = scalar_select %p374, %s373, 11
      %s376 = smul.addr %s375, 8
      %s377 = scalar_lea.vmem %s9, %s376
      %s378 = smul.u32 3, %s21
      %s379 = smul.u32 3, %s21
      %p380 = scmp.lt.s32.totalorder %s379, 11
      %s381 = scalar_select %p380, %s379, 11
      %s382 = smul.addr %s381, 8
      %s383 = scalar_lea.vmem %s10, %s382
      %s384 = smul.u32 3, %s21
      %v386 = vld [vmem:[%s371] sm:$0xff]
      %v387 = vld [vmem:[%s371 + $0x8] sm:$0xff]
      %v388 = vld [vmem:[%s371 + $0x10] sm:$0xff]
      %v389 = vpack.c.bf16 %v387, %v386
      %v390 = vpack.c.bf16 %v388, %v388
      %v391 = vld [vmem:[%s1] sm:$0xf]
      %v392 = vld [vmem:[%s1 + $0x4] sm:$0xf]
      %v393 = vld [vmem:[%s2] sm:$0x1]
      %v395 = vlaneseq
      %v396 = vshrl.u32 %v395, 7
      %v397 = vsub.s32 0, %v396
      %v398 = vrot.slane %v393, %v397
      %v402 = vunpack.c.l.b16 %v391
      %v403 = vunpack.c.l.b16 %v392
      %v404 = vpack.c.b16 %v403, %v402
      %vm406 = vcmask 130048
      %v408 = vsel %vm406, %v389, 0
      %v411 = vsel %vm406, %v390, 0
      %413 = vmatprep.subr.bf16.mxu0 0
      %414 = vmatpush1.bf16.msra.mxu0 %v404
      %415 = vmatprep.subr.bf16.mxu0 0
      %416 = vmatpush1.bf16.msra.mxu0 0
      %417 = vmatprep.subr.bf16.mxu0 0
      %418 = vmatpush1.bf16.msra.mxu0 0
      %419 = vmatprep.subr.bf16.mxu0 0
      %420 = vmatpush1.bf16.msra.mxu0 0
      %421 = vmatprep.subr.bf16.mxu0 0
      %422 = vmatpush1.bf16.msra.mxu0 0
      %423 = vmatprep.subr.bf16.mxu0 0
      %424 = vmatpush1.bf16.msra.mxu0 0
      %425 = vmatprep.subr.bf16.mxu0 0
      %426 = vmatpush1.bf16.msra.mxu0 0
      %427 = vmatprep.subr.bf16.mxu0 0
      %428 = vmatpush1.bf16.msra.mxu0 0
      %429 = vmatprep.subr.bf16.mxu0 0
      %430 = vmatpush1.bf16.msra.mxu0 0
      %431 = vmatprep.subr.bf16.mxu0 0
      %432 = vmatpush1.bf16.msra.mxu0 0
      %433 = vmatprep.subr.bf16.mxu0 0
      %434 = vmatpush1.bf16.msra.mxu0 0
      %435 = vmatprep.subr.bf16.mxu0 0
      %436 = vmatpush1.bf16.msra.mxu0 0
      %437 = vmatprep.subr.bf16.mxu0 0
      %438 = vmatpush1.bf16.msra.mxu0 0
      %439 = vmatprep.subr.bf16.mxu0 0
      %440 = vmatpush1.bf16.msra.mxu0 0
      %441 = vmatprep.subr.bf16.mxu0 0
      %442 = vmatpush1.bf16.msra.mxu0 0
      %443 = vmatprep.subr.bf16.mxu0 0
      %444 = vmatpush1.bf16.msra.mxu0 0
      %445 = vmatprep.mubr.bf16.mxu0 0
      %446 = vmatmul.mubr.bf16.gmra.mrb[0].mxu0 %v408
      %v447 = vpop.f32.mrb[0].mxu0
      %v448 = vadd.f32 %v398, %v447
      %v449 = vpop.f32.mrb[0].mxu0
      %v450 = vpop.f32.mrb[0].mxu0
      %v451 = vadd.f32 %v398, %v450
      %v452 = vpop.f32.mrb[0].mxu0
      %453 = vmatprep.mubr.bf16.mxu0 0
      %454 = vmatmul.mubr.bf16.gmra.mrb[0].mxu0 %v411
      %v455 = vpop.f32.mrb[0].mxu0
      %v456 = vadd.f32 %v398, %v455
      %v457 = vpop.f32.mrb[0].mxu0
      %v458 = vpop.f32.mrb[0].mxu0
      %v459 = vpop.f32.mrb[0].mxu0
      %460 = vdwg.mxu0
      %v461 = vmax.f32 %v448, 0.0
      %v462 = vmax.f32 %v451, 0.0
      %v463 = vmax.f32 %v456, 0.0
      %v464 = vpack.c.bf16 %v462, %v461
      %v465 = vpack.c.bf16 %v463, %v463
      %v466 = vld [vmem:[%s3] sm:$0xf]
      %v467 = vld [vmem:[%s3 + $0x4] sm:$0xf]
      %v468 = vld [vmem:[%s3 + $0x8] sm:$0xf]
      %v469 = vld [vmem:[%s3 + $0xc] sm:$0xf]
      %v470 = vld [vmem:[%s4] sm:$0x1]
      %v472 = vlaneseq
      %v473 = vshrl.u32 %v472, 7
      %v474 = vsub.s32 0, %v473
      %v475 = vrot.slane %v470, %v474
      %v481 = vunpack.c.l.b16 %v466
      %v482 = vunpack.c.l.b16 %v467
      %v483 = vunpack.c.l.b16 %v468
      %v484 = vunpack.c.l.b16 %v469
      %v485 = vpack.c.b16 %v482, %v481
      %v486 = vpack.c.b16 %v484, %v483
      %vm489 = vcmask 261120
      %v491 = vsel %vm489, %v464, 0
      %v494 = vsel %vm489, %v465, 0
      %496 = vmatprep.subr.bf16.mxu0 0
      %497 = vmatpush1.bf16.msra.mxu0 %v485
      %498 = vmatprep.subr.bf16.mxu0 0
      %499 = vmatpush1.bf16.msra.mxu0 %v486
      %500 = vmatprep.subr.bf16.mxu0 0
      %501 = vmatpush1.bf16.msra.mxu0 0
      %502 = vmatprep.subr.bf16.mxu0 0
      %503 = vmatpush1.bf16.msra.mxu0 0
      %504 = vmatprep.subr.bf16.mxu0 0
      %505 = vmatpush1.bf16.msra.mxu0 0
      %506 = vmatprep.subr.bf16.mxu0 0
      %507 = vmatpush1.bf16.msra.mxu0 0
      %508 = vmatprep.subr.bf16.mxu0 0
      %509 = vmatpush1.bf16.msra.mxu0 0
      %510 = vmatprep.subr.bf16.mxu0 0
      %511 = vmatpush1.bf16.msra.mxu0 0
      %512 = vmatprep.subr.bf16.mxu0 0
      %513 = vmatpush1.bf16.msra.mxu0 0
      %514 = vmatprep.subr.bf16.mxu0 0
      %515 = vmatpush1.bf16.msra.mxu0 0
      %516 = vmatprep.subr.bf16.mxu0 0
      %517 = vmatpush1.bf16.msra.mxu0 0
      %518 = vmatprep.subr.bf16.mxu0 0
      %519 = vmatpush1.bf16.msra.mxu0 0
      %520 = vmatprep.subr.bf16.mxu0 0
      %521 = vmatpush1.bf16.msra.mxu0 0
      %522 = vmatprep.subr.bf16.mxu0 0
      %523 = vmatpush1.bf16.msra.mxu0 0
      %524 = vmatprep.subr.bf16.mxu0 0
      %525 = vmatpush1.bf16.msra.mxu0 0
      %526 = vmatprep.subr.bf16.mxu0 0
      %527 = vmatpush1.bf16.msra.mxu0 0
      %528 = vmatprep.mubr.bf16.mxu0 0
      %529 = vmatmul.mubr.bf16.gmra.mrb[0].mxu0 %v491
      %v530 = vpop.f32.mrb[0].mxu0
      %v531 = vadd.f32 %v475, %v530
      %v532 = vpop.f32.mrb[0].mxu0
      %v533 = vpop.f32.mrb[0].mxu0
      %v534 = vadd.f32 %v475, %v533
      %v535 = vpop.f32.mrb[0].mxu0
      %536 = vmatprep.mubr.bf16.mxu0 0
      %537 = vmatmul.mubr.bf16.gmra.mrb[0].mxu0 %v494
      %v538 = vpop.f32.mrb[0].mxu0
      %v539 = vadd.f32 %v475, %v538
      %v540 = vpop.f32.mrb[0].mxu0
      %v541 = vpop.f32.mrb[0].mxu0
      %v542 = vpop.f32.mrb[0].mxu0
      %543 = vdwg.mxu0
      %v544 = vmax.f32 %v531, 0.0
      %v545 = vmax.f32 %v534, 0.0
      %v546 = vmax.f32 %v539, 0.0
      %v547 = vpack.c.bf16 %v545, %v544
      %v548 = vpack.c.bf16 %v546, %v546
      %v549 = vld [vmem:[%s5] sm:$0xf]
      %v550 = vld [vmem:[%s5 + $0x4] sm:$0xf]
      %v551 = vld [vmem:[%s5 + $0x8] sm:$0xf]
      %v552 = vld [vmem:[%s5 + $0xc] sm:$0xf]
      %v553 = vld [vmem:[%s6] sm:$0x1]
      %v555 = vlaneseq
      %v556 = vshrl.u32 %v555, 7
      %v557 = vsub.s32 0, %v556
      %v558 = vrot.slane %v553, %v557
      %v564 = vunpack.c.l.b16 %v549
      %v565 = vunpack.c.l.b16 %v550
      %v566 = vunpack.c.l.b16 %v551
      %v567 = vunpack.c.l.b16 %v552
      %v568 = vpack.c.b16 %v565, %v564
      %v569 = vpack.c.b16 %v567, %v566
      %v573 = vsel %vm489, %v547, 0
      %v576 = vsel %vm489, %v548, 0
      %578 = vmatprep.subr.bf16.mxu0 0
      %579 = vmatpush1.bf16.msra.mxu0 %v568
      %580 = vmatprep.subr.bf16.mxu0 0
      %581 = vmatpush1.bf16.msra.mxu0 %v569
      %582 = vmatprep.subr.bf16.mxu0 0
      %583 = vmatpush1.bf16.msra.mxu0 0
      %584 = vmatprep.subr.bf16.mxu0 0
      %585 = vmatpush1.bf16.msra.mxu0 0
      %586 = vmatprep.subr.bf16.mxu0 0
      %587 = vmatpush1.bf16.msra.mxu0 0
      %588 = vmatprep.subr.bf16.mxu0 0
      %589 = vmatpush1.bf16.msra.mxu0 0
      %590 = vmatprep.subr.bf16.mxu0 0
      %591 = vmatpush1.bf16.msra.mxu0 0
      %592 = vmatprep.subr.bf16.mxu0 0
      %593 = vmatpush1.bf16.msra.mxu0 0
      %594 = vmatprep.subr.bf16.mxu0 0
      %595 = vmatpush1.bf16.msra.mxu0 0
      %596 = vmatprep.subr.bf16.mxu0 0
      %597 = vmatpush1.bf16.msra.mxu0 0
      %598 = vmatprep.subr.bf16.mxu0 0
      %599 = vmatpush1.bf16.msra.mxu0 0
      %600 = vmatprep.subr.bf16.mxu0 0
      %601 = vmatpush1.bf16.msra.mxu0 0
      %602 = vmatprep.subr.bf16.mxu0 0
      %603 = vmatpush1.bf16.msra.mxu0 0
      %604 = vmatprep.subr.bf16.mxu0 0
      %605 = vmatpush1.bf16.msra.mxu0 0
      %606 = vmatprep.subr.bf16.mxu0 0
      %607 = vmatpush1.bf16.msra.mxu0 0
      %608 = vmatprep.subr.bf16.mxu0 0
      %609 = vmatpush1.bf16.msra.mxu0 0
      %610 = vmatprep.mubr.bf16.mxu0 0
      %611 = vmatmul.mubr.bf16.gmra.mrb[0].mxu0 %v573
      %v612 = vpop.f32.mrb[0].mxu0
      %v613 = vadd.f32 %v558, %v612
      %v614 = vpop.f32.mrb[0].mxu0
      %v615 = vpop.f32.mrb[0].mxu0
      %v616 = vadd.f32 %v558, %v615
      %v617 = vpop.f32.mrb[0].mxu0
      %618 = vmatprep.mubr.bf16.mxu0 0
      %619 = vmatmul.mubr.bf16.gmra.mrb[0].mxu0 %v576
      %v620 = vpop.f32.mrb[0].mxu0
      %v621 = vadd.f32 %v558, %v620
      %v622 = vpop.f32.mrb[0].mxu0
      %v623 = vpop.f32.mrb[0].mxu0
      %v624 = vpop.f32.mrb[0].mxu0
      %625 = vdwg.mxu0
      %v626 = vmax.f32 %v613, -20.0
      %v627 = vmax.f32 %v616, -20.0
      %v628 = vmax.f32 %v621, -20.0
      %v629 = vmin.f32 %v626, 2.0
      %v630 = vmin.f32 %v627, 2.0
      %v631 = vmin.f32 %v628, 2.0
      %v632 = vmul.f32 %v629, 1.442695
      %v633 = vpow.pop %v632
      %v634 = vmul.f32 %v630, 1.442695
      %v635 = vpow.pop %v634
      %v636 = vmul.f32 %v631, 1.442695
      %v637 = vpow.pop %v636
      %v638 = vld [vmem:[%s377] sm:$0xff]
      %v639 = vld [vmem:[%s377 + $0x8] sm:$0xff]
      %v640 = vld [vmem:[%s377 + $0x10] sm:$0xff]
      %644 = vrot.lane.b32.xlu0 %v638, 6
      %v645 = vpop.permute.xlu0 %644
      %646 = vrot.lane.b32.xlu0 %v639, 6
      %v647 = vpop.permute.xlu0 %646
      %648 = vrot.lane.b32.xlu0 %v640, 6
      %v649 = vpop.permute.xlu0 %648
      %v653 = vmul.f32 %v633, %v645
      %v654 = vmul.f32 %v635, %v647
      %v655 = vmul.f32 %v637, %v649
      %659 = vrot.lane.b32.xlu0 %v653, 122
      %v660 = vpop.permute.xlu0 %659
      %661 = vrot.lane.b32.xlu0 %v654, 122
      %v662 = vpop.permute.xlu0 %661
      %663 = vrot.lane.b32.xlu0 %v655, 122
      %v664 = vpop.permute.xlu0 %663
      %v668 = vadd.f32 %v613, %v660
      %v669 = vadd.f32 %v616, %v662
      %v670 = vadd.f32 %v621, %v664
      %v671 = vand.u32 2147483647, %v668
      %v672 = vand.u32 2147483647, %v669
      %v673 = vand.u32 2147483647, %v670
      %v674 = vmul.f32 %v671, -2.0
      %v675 = vmul.f32 %v672, -2.0
      %v676 = vmul.f32 %v673, -2.0
      %v677 = vmul.f32 %v674, 1.442695
      %v678 = vpow.pop %v677
      %v679 = vmul.f32 %v675, 1.442695
      %v680 = vpow.pop %v679
      %v681 = vmul.f32 %v676, 1.442695
      %v682 = vpow.pop %v681
      %v683 = vadd.f32 %v678, 1.0
      %v684 = vadd.f32 %v680, 1.0
      %v685 = vadd.f32 %v682, 1.0
      %v686 = vrcp.pop %v683
      %v687 = vrcp.pop %v684
      %v688 = vrcp.pop %v685
      %v689 = vmul.f32 %v683, %v686
      %v690 = vmul.f32 %v684, %v687
      %v691 = vmul.f32 %v685, %v688
      %v692 = vsub.f32 2.0, %v689
      %v693 = vsub.f32 2.0, %v690
      %v694 = vsub.f32 2.0, %v691
      %v695 = vmul.f32 %v686, %v692
      %v696 = vmul.f32 %v687, %v693
      %v697 = vmul.f32 %v688, %v694
      %vm698 = vcmp.ge.f32.partialorder %v668, 0.0
      %vm699 = vcmp.ge.f32.partialorder %v669, 0.0
      %vm700 = vcmp.ge.f32.partialorder %v670, 0.0
      %v701 = vsel %vm698, 1.0, -1.0
      %v702 = vsel %vm699, 1.0, -1.0
      %v703 = vsel %vm700, 1.0, -1.0
      %v704 = vsub.f32 1.0, %v678
      %v705 = vsub.f32 1.0, %v680
      %v706 = vsub.f32 1.0, %v682
      %v707 = vmul.f32 %v701, %v704
      %v708 = vmul.f32 %v702, %v705
      %v709 = vmul.f32 %v703, %v706
      %v710 = vmul.f32 %v707, %v695
      %v711 = vmul.f32 %v708, %v696
      %v712 = vmul.f32 %v709, %v697
      %v713 = vld [vmem:[%s7] sm:$0x1]
      %v715 = vlaneseq
      %v716 = vshrl.u32 %v715, 7
      %v717 = vsub.s32 0, %v716
      %v718 = vrot.slane %v713, %v717
      %v720 = vmul.f32 %v710, %v718
      %v721 = vmul.f32 %v711, %v718
      %v722 = vmul.f32 %v712, %v718
      %v723 = vld [vmem:[%s8] sm:$0x1]
      %v725 = vlaneseq
      %v726 = vshrl.u32 %v725, 7
      %v727 = vsub.s32 0, %v726
      %v728 = vrot.slane %v723, %v727
      %v730 = vadd.f32 %v720, %v728
      %v731 = vadd.f32 %v721, %v728
      %v732 = vadd.f32 %v722, %v728
      %v733 = vmul.f32 %v638, -0.5
      %v734 = vmul.f32 %v639, -0.5
      %v735 = vmul.f32 %v640, -0.5
      %v736 = vmul.f32 %v733, %v638
      %v737 = vmul.f32 %v734, %v639
      %v738 = vmul.f32 %v735, %v640
      %742 = vrot.lane.b32.xlu0 %v629, 122
      %v743 = vpop.permute.xlu0 %742
      %744 = vrot.lane.b32.xlu0 %v630, 122
      %v745 = vpop.permute.xlu0 %744
      %746 = vrot.lane.b32.xlu0 %v631, 122
      %v747 = vpop.permute.xlu0 %746
      %v751 = vsub.f32 %v736, %v743
      %v752 = vsub.f32 %v737, %v745
      %v753 = vsub.f32 %v738, %v747
      %v754 = vsub.f32 %v751, 0.9189385
      %v755 = vsub.f32 %v752, 0.9189385
      %v756 = vsub.f32 %v753, 0.9189385
      %v757 = vmul.f32 %v668, -2.0
      %v758 = vmul.f32 %v669, -2.0
      %v759 = vmul.f32 %v670, -2.0
      %v760 = vmax.f32 %v757, 0.0
      %v761 = vmax.f32 %v758, 0.0
      %v762 = vmax.f32 %v759, 0.0
      %v763 = vlog2.pop %v683
      %v764 = vmul.f32 %v763, 0.6931472
      %v765 = vlog2.pop %v684
      %v766 = vmul.f32 %v765, 0.6931472
      %v767 = vlog2.pop %v685
      %v768 = vmul.f32 %v767, 0.6931472
      %v769 = vadd.f32 %v760, %v764
      %v770 = vadd.f32 %v761, %v766
      %v771 = vadd.f32 %v762, %v768
      %v772 = vsub.f32 0.6931472, %v668
      %v773 = vsub.f32 0.6931472, %v669
      %v774 = vsub.f32 0.6931472, %v670
      %v775 = vsub.f32 %v772, %v769
      %v776 = vsub.f32 %v773, %v770
      %v777 = vsub.f32 %v774, %v771
      %v778 = vmul.f32 %v775, 2.0
      %v779 = vmul.f32 %v776, 2.0
      %v780 = vmul.f32 %v777, 2.0
      %v781 = vsub.f32 %v754, %v778
      %v782 = vsub.f32 %v755, %v779
      %v783 = vsub.f32 %v756, %v780
      %787 = vrot.lane.b32.xlu0 %v781, 6
      %v788 = vpop.permute.xlu0 %787
      %789 = vrot.lane.b32.xlu0 %v782, 6
      %v790 = vpop.permute.xlu0 %789
      %791 = vrot.lane.b32.xlu0 %v783, 6
      %v792 = vpop.permute.xlu0 %791
      %vm796 = vcmask 48128
      %v797 = vsel %vm796, %v730, %v788
      %v798 = vsel %vm796, %v731, %v790
      %v799 = vsel %vm796, %v732, %v792
      %vm800 = vcmask 97280
      %801 = vst.msk [vmem:[%s383] sm:$0xff] %vm800, %v797
      %802 = vst.msk [vmem:[%s383 + $0x8] sm:$0xff] %vm800, %v798
      %803 = vst.msk [vmem:[%s383 + $0x10] sm:$0xff] %vm800, %v799
      %s804 = smul.u32 3, %s21
      %p805 = scmp.lt.s32.totalorder %s804, 11
      %s806 = scalar_select %p805, %s804, 11
      %s807 = smul.addr %s806, 8
      %s808 = scalar_lea.vmem %s10, %s807
      // Predicated region
      $region61: #{_lambda_.1} parent=59 // pred_check
        %p809 = pneg %p259
      $region62: #{_lambda_.1} parent=59 // pred_check_branch
        %811 = sbr.rel (%p809) target = $region64
      $region63: #{_lambda_.1} parent=59 // pred_region
        %s812 = smul.u32 3, %s21
      $region64: #{_lambda_.1} parent=59 // pred_fallthru
        _
    $region60: #{_lambda_.1} parent=5 // pred_fallthru
      _
    %p813 = scmp.le.s32.totalorder 2, %s16
    // Predicated region
    $region65: #{_lambda_.1} parent=5 // pred_check
      %p814 = pneg %p813
    $region66: #{_lambda_.1} parent=5 // pred_check_branch
      %816 = sbr.rel (%p814) target = $region68
    $region67: #{_lambda_.1} parent=5 // pred_region
      %s817 = ssub.s32 %s16, 2
      // Predicated region
      $region69: #{_lambda_.1} parent=67 // pred_check
        %p818 = pneg %p265
      $region70: #{_lambda_.1} parent=67 // pred_check_branch
        %820 = sbr.rel (%p818) target = $region72
      $region71: #{_lambda_.1} parent=67 // pred_region
        %s821 = smul.u32 3, %s22
        %p822 = scmp.lt.s32.totalorder %s821, 11
        %s823 = scalar_select %p822, %s821, 11
        %s824 = smul.addr %s823, 8
        %s825 = scalar_lea.vmem %s10, %s824
      $region72: #{_lambda_.1} parent=67 // pred_fallthru
        _
    $region68: #{_lambda_.1} parent=5 // pred_fallthru
      _
  $region6: #{_lambda_.1} parent=0 // loop_footer
    %s20 = sadd.s32 1, %s16
  $region7: #{_lambda_.1} parent=0 // loop_footer_branch
    %15 = sbr.rel target = $region3
  $region8: #{_lambda_.1} parent=0 // loop_exit
    _

</llo_original>
